<compile_context>
chip_gen: v7x
topology: tpu7x:2x2x1
jax: 0.10.0
libtpu: 0.0.40
codegen_flags: <defaults>
</compile_context>

<pallas_src>
import jax
import jax.numpy as jnp
from jax.experimental import pallas as pl
from jax.experimental.pallas import tpu as pltpu


def _round_up(x, m):
    return -(-x // m) * m


def _pick_tile_h(width):
    """Largest 128-multiple divisor of `width` that leaves >= 2 H tiles (v7x
    megacore occupancy); otherwise the largest dividing candidate; otherwise
    the full (possibly non-128-multiple) width as a single block."""
    fallback = None
    for cand in (512, 256, 128):
        if width % cand == 0:
            if width // cand >= 2:
                return cand
            if fallback is None:
                fallback = cand
    return fallback if fallback is not None else width


def _pick_tile_n(n_rows, tile_h, itemsize, masked, sub):
    # Budget for the double-buffered input DMAs; conservative so the whole
    # kernel (buffers + accumulator + temporaries) fits v7x's 64 MiB VMEM.
    budget = 24 * 1024 * 1024
    lanes = _round_up(tile_h, 128)           # VMEM pads the lane dim to 128
    per_row = 2 * lanes * itemsize
    if masked:
        per_row += 2 * 128 * 4               # (tile_n, 1) f32 mask block
    if n_rows <= sub:
        return n_rows                        # tiny input: single full block
    t = max(sub, int(budget // per_row))
    t = min(t, 4096, n_rows)
    step = 512 if t >= 512 else sub
    return max(sub, (t // step) * step)


def _pick_chunk(tile_n):
    # Inner accumulation chunk: bounds per-step f32 temporaries for big tiles.
    return 512 if (tile_n > 512 and tile_n % 512 == 0) else tile_n


def _make_kernel(*, masked, tile_n, tile_h, chunk, n_rows, ragged, inv_const):
    """Build the reduction kernel, specialized on all static parameters."""
    n_chunks = tile_n // chunk
    fold8 = (chunk % 8 == 0)

    def kernel(*refs):
        if masked:
            inv_ref, seq_ref, msk_ref, out_ref, acc_ref = refs
        else:
            seq_ref, out_ref, acc_ref = refs

        i = pl.program_id(1)                 # N (reduction) step, innermost
        last = pl.num_programs(1) - 1

        @pl.when(i == 0)
        def _():
            acc_ref[...] = jnp.zeros_like(acc_ref)

        def load(ref, c):
            if n_chunks == 1:
                return ref[...]
            start = pl.multiple_of(c * chunk, chunk)
            return ref[pl.ds(start, chunk), :]

        def accum_chunk(c, tail):
            s = load(seq_ref, c).astype(jnp.float32)          # (chunk, tile_h)
            if masked:
                s = s * load(msk_ref, c)                      # (chunk, 1) f32
            if tail:
                # Row-validity select for the ragged last N tile.  Applied to
                # the finished per-row value so OOB garbage (possibly NaN/Inf)
                # never reaches the accumulator (select does not propagate NaN).
                row = (i * tile_n + c * chunk
                       + jax.lax.broadcasted_iota(jnp.int32, (chunk, 1), 0))
                s = jnp.where(row < n_rows, s, 0.0)
            if fold8:
                # Pure vertical vreg adds into the (8, tile_h) accumulator:
                # no cross-sublane (XLU) work in the streaming loop.
                acc_ref[...] += jnp.sum(s.reshape(chunk // 8, 8, tile_h), axis=0)
            else:
                acc_ref[...] += jnp.sum(s, axis=0, keepdims=True)

        def accum_tile(tail):
            if n_chunks == 1:
                accum_chunk(0, tail)
            else:
                def body(c, carry):
                    accum_chunk(c, tail)
                    return carry
                jax.lax.fori_loop(0, n_chunks, body, 0, unroll=True)

        if ragged:
            # Keep the common path free of the validity select; only the last
            # N step pays for it.
            @pl.when(i != last)
            def _():
                accum_tile(False)
        else:
            accum_tile(False)

        @pl.when(i == last)
        def _():
            if ragged:
                accum_tile(True)
            # Single cross-sublane reduce + scale, once per H tile.
            total = jnp.sum(acc_ref[...], axis=0, keepdims=True)  # (1, tile_h)
            scale = inv_ref[0] if masked else inv_const
            out_ref[...] = (total * scale).astype(out_ref.dtype)

    return kernel


def avg_readout(seq, msk=None, *, tile_n=None, tile_h=None, chunk=None):
    """Pallas AvgReadout.  seq: (N, H); msk: optional (N,).  Returns (H,).

    Note: sum(msk) == 0 yields inf/nan, matching torch's division by zero.
    """
    N, H = seq.shape
    itemsize = jnp.dtype(seq.dtype).itemsize
    sub = {4: 8, 2: 16, 1: 32}.get(itemsize, 8)   # min sublane multiple
    masked = msk is not None

    # --- unmasked path: lane-fold narrow H so VMEM / loads are lane-dense ----
    fold = 1
    if (not masked) and H < 128 and 128 % H == 0:
        k = 128 // H
        if N % k == 0 and N >= k:
            fold = k
    seq_k = seq.reshape(N // fold, fold * H) if fold > 1 else seq   # free reshape
    n_rows, width = seq_k.shape

    if tile_h is None:
        tile_h = _pick_tile_h(width)
    if width % tile_h != 0:
        tile_h = width                      # fall back to one full-width block
    grid_h = width // tile_h

    if tile_n is None:
        tile_n = _pick_tile_n(n_rows, tile_h, itemsize, masked, sub)
    else:
        tile_n = max(1, min(int(tile_n), n_rows))
        if tile_n < n_rows:
            tile_n = max(sub, (tile_n // sub) * sub)
    if chunk is None:
        chunk = _pick_chunk(tile_n)
    else:
        chunk = int(chunk)
        if chunk <= 0 or tile_n % chunk != 0:
            chunk = tile_n

    grid_n = -(-n_rows // tile_n)           # ceil div; last tile may be ragged
    ragged = grid_n * tile_n != n_rows

    if masked:
        # Mask kept in float32 (weighted masks keep full precision vs bf16 seq).
        msk_col = msk.reshape(N, 1).astype(jnp.float32)
        cnt = jnp.sum(msk_col)
        inv = (1.0 / cnt).reshape(1).astype(jnp.float32)   # 1/0 -> inf, as torch
        inv_const = None
    else:
        msk_col = None
        inv = None
        inv_const = 1.0 / float(N)          # static: baked into the kernel

    kernel = _make_kernel(masked=masked, tile_n=tile_n, tile_h=tile_h,
                          chunk=chunk, n_rows=n_rows, ragged=ragged,
                          inv_const=inv_const)

    # VMEM limit from the actual footprint (double-buffered inputs + acc +
    # output + f32 temporaries), with margin — not a fraction of chip VMEM.
    lanes = _round_up(tile_h, 128)
    rows_pad = _round_up(tile_n, sub)
    vmem_est = 2 * rows_pad * lanes * itemsize            # seq double buffer
    if masked:
        vmem_est += 2 * rows_pad * 128 * 4                # mask double buffer
    vmem_est += 8 * lanes * 4 + 2 * lanes * itemsize      # accumulator + out
    vmem_est += 4 * _round_up(chunk, sub) * lanes * 4     # f32 temporaries
    vmem_limit = int(vmem_est * 1.25) + (2 << 20)
    vmem_limit = max(8 * 1024 * 1024, min(vmem_limit, 64 * 1024 * 1024))

    acc_rows = 8 if chunk % 8 == 0 else 1
    seq_spec = pl.BlockSpec((tile_n, tile_h), lambda j, i: (i, j))
    out_spec = pl.BlockSpec((1, tile_h), lambda j, i: (0, j))   # resident out

    if masked:
        in_specs = [
            pl.BlockSpec(memory_space=pltpu.MemorySpace.SMEM),  # 1/sum(msk)
            seq_spec,
            pl.BlockSpec((tile_n, 1), lambda j, i: (i, 0)),     # mask column
        ]
        operands = (inv, seq_k, msk_col)
    else:
        in_specs = [seq_spec]
        operands = (seq_k,)

    out = pl.pallas_call(
        kernel,
        out_shape=jax.ShapeDtypeStruct((1, width), seq.dtype),
        grid_spec=pltpu.PrefetchScalarGridSpec(
            num_scalar_prefetch=0,
            grid=(grid_h, grid_n),
            in_specs=in_specs,
            out_specs=out_spec,
            scratch_shapes=[pltpu.VMEM((acc_rows, tile_h), jnp.float32)],
        ),
        compiler_params=pltpu.CompilerParams(
            dimension_semantics=("parallel", "arbitrary"),
            vmem_limit_bytes=int(vmem_limit),
        ),
    )(*operands)

    if fold > 1:
        # Combine the k lane-folded segments (tiny 128-wide add), f32 accumulate.
        seg = jnp.sum(out.reshape(fold, H).astype(jnp.float32), axis=0)
        return seg.astype(seq.dtype)
    return out.reshape(width)


if __name__ == "__main__":
    key = jax.random.PRNGKey(0)
    k1, k2, k3, k4 = jax.random.split(key, 4)

    # Small shapes consistent with the module: N=16 nodes, hidden=32.
    N, H = 16, 32
    seq = jax.random.normal(k1, (N, H), dtype=jnp.float32)
    msk = (jax.random.uniform(k2, (N,)) > 0.5).astype(jnp.float32)
    msk = msk.at[0].set(1.0)   # avoid 0/0 in the demo (torch would nan too)

    # Path 1: no mask -> mean over axis 0 (exercises lane-folding for H<128).
    out_mean = jax.block_until_ready(avg_readout(seq, None))
    ref_mean = jnp.mean(seq, axis=0)
    assert out_mean.shape == (H,)
    assert jnp.allclose(out_mean, ref_mean, atol=1e-5, rtol=1e-5)

    # Path 2: masked weighted average (scale from SMEM).
    out_msk = jax.block_until_ready(avg_readout(seq, msk))
    ref_msk = jnp.sum(seq * msk[:, None], axis=0) / jnp.sum(msk)
    assert out_msk.shape == (H,)
    assert jnp.allclose(out_msk, ref_msk, atol=1e-5, rtol=1e-5)

    # Ragged N: exercises the in-kernel iota tail mask (no padding copy).
    N2 = 13
    seq2 = jax.random.normal(k3, (N2, H), dtype=jnp.float32)
    msk2 = (jax.random.uniform(k4, (N2,)) > 0.5).astype(jnp.float32)
    msk2 = msk2.at[0].set(1.0)
    out2 = jax.block_until_ready(avg_readout(seq2, None, tile_n=8))
    assert jnp.allclose(out2, jnp.mean(seq2, axis=0), atol=1e-5, rtol=1e-5)
    out2m = jax.block_until_ready(avg_readout(seq2, msk2, tile_n=8))
    ref2m = jnp.sum(seq2 * msk2[:, None], axis=0) / jnp.sum(msk2)
    assert jnp.allclose(out2m, ref2m, atol=1e-5, rtol=1e-5)

    # Wider H: two H tiles ("parallel" axis), multi-step ragged reduction and
    # the chunked (fori_loop) accumulation path.
    N3, H3 = 40, 256
    seq3 = jax.random.normal(k1, (N3, H3), dtype=jnp.float32)
    msk3 = (jax.random.uniform(k2, (N3,)) > 0.5).astype(jnp.float32)
    msk3 = msk3.at[0].set(1.0)
    out3 = jax.block_until_ready(avg_readout(seq3, msk3, tile_n=16, chunk=8))
    ref3 = jnp.sum(seq3 * msk3[:, None], axis=0) / jnp.sum(msk3)
    assert jnp.allclose(out3, ref3, atol=1e-5, rtol=1e-5)
    out3u = jax.block_until_ready(avg_readout(seq3, None, tile_n=16, chunk=8))
    assert jnp.allclose(out3u, jnp.mean(seq3, axis=0), atol=1e-5, rtol=1e-5)

    print("KERNEL_OK")
</pallas_src>

<mosaic_0001>
module attributes {stable_mosaic.version = 11 : i64} {
  func.func @kernel(%arg0: i32, %arg1: i32, %arg2: memref<4x128xf32, #tpu.memory_space<vmem>>, %arg3: memref<1x128xf32, #tpu.memory_space<vmem>>, %arg4: memref<1x128xf32, #tpu.memory_space<vmem>>) attributes {dimension_semantics = [#tpu.dimension_semantics<parallel>, #tpu.dimension_semantics<arbitrary>], iteration_bounds = array<i64: 1, 1>, scalar_prefetch = 0 : i64, scratch_operands = 1 : i64, tpu.core_type = #tpu.core_type<tc>, window_params = [{transform_indices = @transform_0, window_bounds = array<i64: 4, 128>}, {transform_indices = @transform_1, window_bounds = array<i64: 1, 128>}]} {
    %c0_i32 = arith.constant 0 : i32
    %0 = arith.cmpi eq, %arg1, %c0_i32 : i32
    %1 = arith.extui %0 : i1 to i32
    %c0_i32_0 = arith.constant 0 : i32
    %2 = arith.cmpi ne, %1, %c0_i32_0 : i32
    scf.if %2 {
      %cst_8 = arith.constant 0.000000e+00 : f32
      %12 = vector.broadcast %cst_8 : f32 to vector<1x128xf32>
      %c0_9 = arith.constant 0 : index
      %c0_10 = arith.constant 0 : index
      %13 = vector.load %arg4[%c0_9, %c0_10] : memref<1x128xf32, #tpu.memory_space<vmem>>, vector<1x128xf32>
      tpu.vector_store %arg4[%c0_9, %c0_10], %12 {strides = array<i32>} : memref<1x128xf32, #tpu.memory_space<vmem>>, vector<1x128xf32>,
    } else {
    }
    %c0 = arith.constant 0 : index
    %c0_1 = arith.constant 0 : index
    %3 = vector.load %arg2[%c0, %c0_1] : memref<4x128xf32, #tpu.memory_space<vmem>>, vector<4x128xf32>
    %c0_2 = arith.constant 0 : index
    %c0_3 = arith.constant 0 : index
    %4 = vector.load %arg4[%c0_2, %c0_3] : memref<1x128xf32, #tpu.memory_space<vmem>>, vector<1x128xf32>
    %cst = arith.constant dense<0.000000e+00> : vector<128xf32>
    %5 = vector.multi_reduction <add>, %3, %cst [0] : vector<4x128xf32> to vector<128xf32>
    %6 = vector.shape_cast %5 : vector<128xf32> to vector<1x128xf32>
    %7 = arith.addf %4, %6 : vector<1x128xf32>
    %c0_4 = arith.constant 0 : index
    %c0_5 = arith.constant 0 : index
    %8 = vector.load %arg4[%c0_4, %c0_5] : memref<1x128xf32, #tpu.memory_space<vmem>>, vector<1x128xf32>
    tpu.vector_store %arg4[%c0_4, %c0_5], %7 {strides = array<i32>} : memref<1x128xf32, #tpu.memory_space<vmem>>, vector<1x128xf32>,
    %c0_i32_6 = arith.constant 0 : i32
    %9 = arith.cmpi eq, %arg1, %c0_i32_6 : i32
    %10 = arith.extui %9 : i1 to i32
    %c0_i32_7 = arith.constant 0 : i32
    %11 = arith.cmpi ne, %10, %c0_i32_7 : i32
    scf.if %11 {
      %c0_8 = arith.constant 0 : index
      %c0_9 = arith.constant 0 : index
      %12 = vector.load %arg4[%c0_8, %c0_9] : memref<1x128xf32, #tpu.memory_space<vmem>>, vector<1x128xf32>
      %cst_10 = arith.constant dense<0.000000e+00> : vector<128xf32>
      %13 = vector.multi_reduction <add>, %12, %cst_10 [0] : vector<1x128xf32> to vector<128xf32>
      %14 = vector.shape_cast %13 : vector<128xf32> to vector<1x128xf32>
      %cst_11 = arith.constant 6.250000e-02 : f32
      %15 = vector.broadcast %cst_11 : f32 to vector<1x128xf32>
      %16 = arith.mulf %14, %15 : vector<1x128xf32>
      %c0_12 = arith.constant 0 : index
      %c0_13 = arith.constant 0 : index
      %17 = vector.load %arg3[%c0_12, %c0_13] : memref<1x128xf32, #tpu.memory_space<vmem>>, vector<1x128xf32>
      tpu.vector_store %arg3[%c0_12, %c0_13], %16 {strides = array<i32>} : memref<1x128xf32, #tpu.memory_space<vmem>>, vector<1x128xf32>,
    } else {
    }
    return
  }
  func.func @transform_0(%arg0: i32, %arg1: i32) -> (i32, i32) {
    %c0_i32 = arith.constant 0 : i32
    return %arg1, %arg0 : i32, i32
  }
  func.func @transform_1(%arg0: i32, %arg1: i32) -> (i32, i32) {
    %c0_i32 = arith.constant 0 : i32
    %c0_i32_0 = arith.constant 0 : i32
    return %c0_i32, %arg0 : i32, i32
  }
}

</mosaic_0001>

<llo_original>
// kernel: tpu_custom_call.1
$region0: #{tpu_custom_call.1}
  #allocation0 [shape = 'u32[]', space=smem, size = 0x4, offset = 0x4, fixed_abs, tag = 'smem constant byte address 0x4 - core index']
  #allocation1 [shape = 'u32[144,128]{1,0:T(1,128)}', space=vmem, size = 0x12000, scoped, tag = 'internal scratch']
  #allocation2 [shape = 'f32[1,128]{1,0:T(1,128)}', space=vmem, size = 0x200, scoped, tag = 'scratch operand']
  %s0 = inlined_call_operand.hbm [shape: f32[4,128], index: 0, kind: input, shape index: {}]
  %s1 = inlined_call_operand.hbm [shape: f32[1,128], index: 1, kind: output, shape index: {}]
  %s2 = sld [smem:[#allocation0]]
  $region26: #{tpu_custom_call.1} parent=0
    _
  %s4 = ssub.s32 1, %s2
  %s5 = scalar_select 0, %s4, %s2
  $region1: #{tpu_custom_call.1} parent=0
    #allocation3 [shape = 'u8[2048]{0}', space=vmem, size = 0x800, scoped, tag = 'input window, operand 0, single buffered']
    #allocation4 [shape = 's32[1]{0}', space=sflag, size = 0x4, scoped, tag = 'scoped memory for tpu_custom_call.1']
    #allocation5 [shape = 's32[1]{0}', space=sflag, size = 0x4, scoped, tag = 'scoped memory for tpu_custom_call.1']
    #allocation6 [shape = 'u8[512]{0}', space=vmem, size = 0x400, scoped, tag = 'output window, operand 0, single buffered']
    %6 = vsyncpa [#allocation4], 0
    %7 = vsyncpa [#allocation5], 0
    // Predicated region
    $region2: #{tpu_custom_call.1} parent=1 // pred_check
      _
    $region3: #{tpu_custom_call.1} parent=1 // pred_check_branch
      %9 = sbr.rel (0) target = $region5
    $region4: #{tpu_custom_call.1} parent=1 // pred_region
      %s11 = ssub.s32 64, 64
      %12 = vsyncadd [#allocation4], %s11
      %s14 = sshll.u32 [#allocation3], 4
      %s15 = int_to_ptr.vmem [resolvable:$true] %s14
      %17 = dma.hbm_to_vmem [thread:$0]  %s0, 64, %s15, [#allocation4]
    $region5: #{tpu_custom_call.1} parent=1 // pred_fallthru
      _
    // Predicated region
    $region6: #{tpu_custom_call.1} parent=1 // pred_check
      _
    $region7: #{tpu_custom_call.1} parent=1 // pred_check_branch
      %19 = sbr.rel (0) target = $region9
    $region8: #{tpu_custom_call.1} parent=1 // pred_region
      %20 = dma.done [#allocation4], 64
    $region9: #{tpu_custom_call.1} parent=1 // pred_fallthru
      _
    %p21 = scmp.eq.s32.totalorder 0, 0
    // Predicated region
    $region10: #{tpu_custom_call.1} parent=1 // pred_check
      %p22 = pneg %p21
    $region11: #{tpu_custom_call.1} parent=1 // pred_check_branch
      %24 = sbr.rel (%p22) target = $region13
    $region12: #{tpu_custom_call.1} parent=1 // pred_region
      %25 = vst [vmem:[#allocation2] sm:$0x1] 0.0
    $region13: #{tpu_custom_call.1} parent=1 // pred_fallthru
      _
    %v26 = vld [vmem:[#allocation3] sm:$0xf]
    %v27 = vld [vmem:[#allocation2] sm:$0x1]
    %vm28 = vcmask 1043456
    %v29 = vsel %vm28, %v26, 0.0
    %v30 = vrot.slane %v29, 4
    %v31 = vadd.f32 %v29, %v30
    %v32 = vrot.slane %v31, 2
    %v33 = vadd.f32 %v31, %v32
    %v34 = vrot.slane %v33, 1
    %v35 = vadd.f32 %v33, %v34
    %v36 = vadd.f32 %v27, %v35
    %37 = vst [vmem:[#allocation2] sm:$0x1] %v36
    // Predicated region
    $region14: #{tpu_custom_call.1} parent=1 // pred_check
      %p38 = pneg %p21
    $region15: #{tpu_custom_call.1} parent=1 // pred_check_branch
      %40 = sbr.rel (%p38) target = $region17
    $region16: #{tpu_custom_call.1} parent=1 // pred_region
      %v41 = vld [vmem:[#allocation2] sm:$0x1]
      %v42 = vadd.f32 %v41, 0.0
      %v43 = vmul.f32 %v42, 0.0625
      %44 = vst [vmem:[#allocation6] sm:$0x1] %v43
    $region17: #{tpu_custom_call.1} parent=1 // pred_fallthru
      _
    // Predicated region
    $region18: #{tpu_custom_call.1} parent=1 // pred_check
      _
    $region19: #{tpu_custom_call.1} parent=1 // pred_check_branch
      %46 = sbr.rel (0) target = $region21
    $region20: #{tpu_custom_call.1} parent=1 // pred_region
      %s48 = ssub.s32 16, 16
      %49 = vsyncadd [#allocation5], %s48
      %s51 = sshll.u32 [#allocation6], 4
      %s52 = int_to_ptr.vmem [resolvable:$true] %s51
      %54 = dma.vmem_to_hbm [thread:$0]  %s52, 16, %s1, [#allocation5]
    $region21: #{tpu_custom_call.1} parent=1 // pred_fallthru
      _
    // Predicated region
    $region22: #{tpu_custom_call.1} parent=1 // pred_check
      _
    $region23: #{tpu_custom_call.1} parent=1 // pred_check_branch
      %56 = sbr.rel (0) target = $region25
    $region24: #{tpu_custom_call.1} parent=1 // pred_region
      %57 = dma.done [#allocation5], 16
    $region25: #{tpu_custom_call.1} parent=1 // pred_fallthru
      _
    %58 = vsyncpa [#allocation4], 1
    %59 = vsyncpa [#allocation5], 1

</llo_original>
